<compile_context>
chip_gen: v5e
topology: v5e:2x2
jax: 0.10.0
libtpu: 0.0.40
codegen_flags: <defaults>
</compile_context>

<pallas_src>
import jax
import jax.numpy as jnp
from jax.experimental import pallas as pl
from jax.experimental.pallas import tpu as pltpu

BOARD_SIZE = 10
BOARD_CELLS = BOARD_SIZE * BOARD_SIZE      # 100
VISION_DICT = {0: 1, 1: 5}                 # agent box=1 (radius 0), other box=5 (radius 2)
HIDDEN = 64
LANES = 128                                # padded feature width for every layer


# ----------------------------- Pallas kernel ------------------------------ #

def _critic_kernel(state_ref, xa_ref, w12_ref, w3_ref, o_ref):
    """Fused Critic forward: board encode + 2 MXU matmuls + VPU output reduce.

    state_ref : SMEM (6,) int32  [ax, ay, ox, oy, px, py]  (scalar prefetch)
    xa_ref    : VMEM (TB, 128) f32   action at cols [100,100+A), 1.0 at bias col
    w12_ref   : VMEM (256, 128) bf16 bias-augmented fc1 (rows 0..127) / fc2 (128..255)
    w3_ref    : VMEM (1, 128)  f32   fc3 weight vector, b3 folded at lane 64
    o_ref     : VMEM (TB, 128) f32   critic value broadcast across all lanes
    """
    tb = xa_ref.shape[0]

    # --- scalar board / visibility logic (scalar unit, SMEM reads) --------- #
    ax, ay = state_ref[0], state_ref[1]
    ox, oy = state_ref[2], state_ref[3]
    px, py = state_ref[4], state_ref[5]
    agent_idx = BOARD_SIZE * ax + ay
    other_idx = BOARD_SIZE * ox + oy
    prey_idx = BOARD_SIZE * px + py

    r_agent = (VISION_DICT[0] - 1) // 2   # 0
    r_other = (VISION_DICT[1] - 1) // 2   # 2
    visible = (
        ((jnp.abs(ax - px) <= r_agent) & (jnp.abs(ay - py) <= r_agent))
        | ((jnp.abs(ox - px) <= r_other) & (jnp.abs(oy - py) <= r_other))
    )

    # --- build the padded input row fully in registers (no scratch) -------- #
    # Reference write order: agent(+1) -> prey(-1 if visible) -> other(+1);
    # later writes win on collisions => priority other > prey > agent.
    col = jax.lax.broadcasted_iota(jnp.int32, (tb, LANES), 1)
    board = jnp.where(
        col == other_idx, 1.0,
        jnp.where(jnp.logical_and(col == prey_idx, visible), -1.0,
                  jnp.where(col == agent_idx, 1.0, 0.0)))
    x = board + xa_ref[...]     # action lanes + constant-1 bias lane pre-formatted

    # --- fc1 / fc2 on the MXU: bf16 operands, f32 accumulation, f32 ReLU --- #
    w1 = w12_ref[0 * LANES:1 * LANES, :]
    w2 = w12_ref[1 * LANES:2 * LANES, :]
    h = jnp.dot(x.astype(jnp.bfloat16), w1, preferred_element_type=jnp.float32)
    h = jnp.maximum(h, 0.0)
    h = jnp.dot(h.astype(jnp.bfloat16), w2, preferred_element_type=jnp.float32)
    h = jnp.maximum(h, 0.0)

    # --- fc3: single useful output column -> VPU multiply + lane reduce ---- #
    out = jnp.sum(h * w3_ref[...], axis=-1, keepdims=True)          # (tb, 1) f32
    o_ref[...] = jnp.broadcast_to(out, (tb, LANES)).astype(o_ref.dtype)


def critic_mlp_pallas(state_i, xa, w12, w3v, *, batch_tile=128):
    """One fused pallas_call.

    Batch axis is a "parallel" grid with constant weight index_maps, so the
    weights are DMA'd once and grid steps shard across v7x's two TensorCores
    when many (state, action) candidates are evaluated at once.  For B<=2
    (the module's case) this is a single whole-array invocation.
    """
    B = xa.shape[0]
    if B <= batch_tile:
        tb, Bp = B, B                              # single grid step, full-dim block
    else:
        tb = batch_tile
        Bp = -(-B // tb) * tb
        if Bp != B:
            xa = jnp.pad(xa, ((0, Bp - B), (0, 0)))
    grid = (Bp // tb,)

    out = pl.pallas_call(
        _critic_kernel,
        out_shape=jax.ShapeDtypeStruct((Bp, LANES), jnp.float32),
        grid_spec=pltpu.PrefetchScalarGridSpec(
            num_scalar_prefetch=1,                 # state ints -> SMEM
            grid=grid,
            in_specs=[
                pl.BlockSpec((tb, LANES), lambda i, s: (i, 0)),          # action+bias tile
                pl.BlockSpec((2 * LANES, LANES), lambda i, s: (0, 0)),   # fc1/fc2 (resident)
                pl.BlockSpec((1, LANES), lambda i, s: (0, 0)),           # fc3 vector (resident)
            ],
            out_specs=pl.BlockSpec((tb, LANES), lambda i, s: (i, 0)),
        ),
        compiler_params=pltpu.CompilerParams(
            dimension_semantics=("parallel",)),
    )(state_i, xa, w12, w3v)
    return out[:B, :1]


# ------------------------- parameter packing / init ------------------------ #

def pack_critic_params(w1, b1, w2, b2, w3, b3, action_size):
    """Pack (pre-transposed) Linear params for the kernel.

    w12 (bf16, 256x128): rows [0,128) = fc1, rows [128,256) = fc2.  Each block
    is bias-augmented: the bias lives in the row that multiplies the
    constant-1 column of the activations, and that row also writes 1.0 into
    hidden column 64 so the "1" is carried through every layer (relies on
    ReLU(1) == 1).  All padding is zero.
    w3v (f32, 1x128): fc3 weight in lanes [0,64), b3 at lane 64.
    """
    in_dim = w1.shape[0]                  # 100 + action_size
    assert in_dim == BOARD_CELLS + action_size
    bias_col = in_dim
    # bias / carry lanes must fit and not collide with real features
    assert bias_col < LANES, "action_size too large for 128-lane packing"
    assert HIDDEN < LANES
    f32 = jnp.float32

    w1a = jnp.zeros((LANES, LANES), f32)
    w1a = w1a.at[:in_dim, :HIDDEN].set(w1)
    w1a = w1a.at[bias_col, :HIDDEN].set(b1)
    w1a = w1a.at[bias_col, HIDDEN].set(1.0)

    w2a = jnp.zeros((LANES, LANES), f32)
    w2a = w2a.at[:HIDDEN, :HIDDEN].set(w2)
    w2a = w2a.at[HIDDEN, :HIDDEN].set(b2)
    w2a = w2a.at[HIDDEN, HIDDEN].set(1.0)

    w12 = jnp.concatenate([w1a, w2a], axis=0).astype(jnp.bfloat16)   # (256, 128)

    w3v = jnp.zeros((1, LANES), f32)
    w3v = w3v.at[0, :HIDDEN].set(w3[:, 0])
    w3v = w3v.at[0, HIDDEN].set(b3)

    return {"w12": w12, "w3v": w3v}


def init_critic_params(key, action_size):
    """Synthetic init matching nn.Linear shapes (weights pre-transposed)."""
    in_dim = BOARD_CELLS + action_size
    ks = jax.random.split(key, 6)

    def u(k, shape, fan_in):
        s = 1.0 / jnp.sqrt(jnp.float32(fan_in))
        return jax.random.uniform(k, shape, jnp.float32, -s, s)

    return {
        "w1": u(ks[0], (in_dim, HIDDEN), in_dim),
        "b1": u(ks[1], (HIDDEN,), in_dim),
        "w2": u(ks[2], (HIDDEN, HIDDEN), HIDDEN),
        "b2": u(ks[3], (HIDDEN,), HIDDEN),
        "w3": u(ks[4], (HIDDEN, 1), HIDDEN),
        "b3": u(ks[5], (), HIDDEN),
    }


# ------------------------------- forward ----------------------------------- #

@jax.jit
def critic_forward(packed, state, action):
    """Full Critic.forward. `state` is (1, 6) float board coordinates."""
    # int(s) truncation; board coordinates are non-negative in this env.
    state_i = state[0].astype(jnp.int32)
    B, A = action.shape
    # Pre-format the non-board part of x: action at cols [100,100+A), 1.0 at
    # the bias column.  Keeps the kernel free of partial-lane stores.
    xa = jnp.zeros((B, LANES), jnp.float32)
    xa = xa.at[:, BOARD_CELLS:BOARD_CELLS + A].set(action.astype(jnp.float32))
    xa = xa.at[:, BOARD_CELLS + A].set(1.0)
    return critic_mlp_pallas(state_i, xa, packed["w12"], packed["w3v"])


# -------------------------- pure-JAX references ----------------------------- #

def _reference_forward(raw, state, action, bf16_weights=False):
    locs = state[0].astype(jnp.int32)
    agent, other, prey = locs[0:2], locs[2:4], locs[4:6]
    agent_idx = BOARD_SIZE * agent[0] + agent[1]
    other_idx = BOARD_SIZE * other[0] + other[1]
    prey_idx = BOARD_SIZE * prey[0] + prey[1]
    r0, r1 = (VISION_DICT[0] - 1) // 2, (VISION_DICT[1] - 1) // 2
    visible = (
        ((jnp.abs(agent[0] - prey[0]) <= r0) & (jnp.abs(agent[1] - prey[1]) <= r0))
        | ((jnp.abs(other[0] - prey[0]) <= r1) & (jnp.abs(other[1] - prey[1]) <= r1))
    )
    board = jnp.zeros(BOARD_CELLS, jnp.float32)
    board = board.at[agent_idx].set(1.0)
    board = jnp.where(visible, board.at[prey_idx].set(-1.0), board)
    board = board.at[other_idx].set(1.0)
    x = jnp.concatenate(
        [jnp.broadcast_to(board[None, :], (action.shape[0], BOARD_CELLS)),
         action.astype(jnp.float32)], axis=1)

    if bf16_weights:
        # Matches the kernel's numerics: bf16 MXU operands, f32 accumulation,
        # f32 epilogue, f32 fc3 vector reduce.
        w1 = raw["w1"].astype(jnp.bfloat16)
        b1 = raw["b1"].astype(jnp.bfloat16).astype(jnp.float32)
        w2 = raw["w2"].astype(jnp.bfloat16)
        b2 = raw["b2"].astype(jnp.bfloat16).astype(jnp.float32)
        h = jnp.dot(x.astype(jnp.bfloat16), w1,
                    preferred_element_type=jnp.float32) + b1
        h = jax.nn.relu(h)
        h = jnp.dot(h.astype(jnp.bfloat16), w2,
                    preferred_element_type=jnp.float32) + b2
        h = jax.nn.relu(h)
        return jnp.dot(h, raw["w3"],
                       precision=jax.lax.Precision.HIGHEST) + raw["b3"]
    else:
        h = jax.nn.relu(x @ raw["w1"] + raw["b1"])
        h = jax.nn.relu(h @ raw["w2"] + raw["b2"])
        return h @ raw["w3"] + raw["b3"]


# --------------------------------- main ------------------------------------ #

if __name__ == "__main__":
    key = jax.random.PRNGKey(0)
    k_params, k_state, k_action = jax.random.split(key, 3)

    action_size = 4
    batch = 2      # exercises the board-duplication branch of the reference

    raw = init_critic_params(k_params, action_size)
    packed = pack_critic_params(raw["w1"], raw["b1"], raw["w2"], raw["b2"],
                                raw["w3"], raw["b3"], action_size)

    # state: (1, 6) integer board locations stored as float (torch casts int(s))
    state = jax.random.randint(k_state, (1, 6), 0, BOARD_SIZE).astype(jnp.float32)
    action = jax.random.normal(k_action, (batch, action_size), jnp.float32)

    out = critic_forward(packed, state, action)
    out = jax.block_until_ready(out)
    assert out.shape == (batch, 1), out.shape

    # Tight check vs a reference that uses identical bf16 weight rounding
    # (catches packing / layout regressions) ...
    ref_bf16 = _reference_forward(raw, state, action, bf16_weights=True)
    assert jnp.allclose(out, ref_bf16, atol=1e-4, rtol=1e-4), (out, ref_bf16)
    # ... and a looser sanity check vs the pure-f32 module semantics.
    ref_f32 = _reference_forward(raw, state, action, bf16_weights=False)
    assert jnp.allclose(out, ref_f32, atol=2e-2, rtol=2e-2), (out, ref_f32)

    print("KERNEL_OK")
</pallas_src>

<mosaic_0001>
module attributes {stable_mosaic.version = 11 : i64} {
  func.func @_critic_kernel(%arg0: i32, %arg1: memref<6xi32, #tpu.memory_space<smem>>, %arg2: memref<2x128xf32, #tpu.memory_space<vmem>>, %arg3: memref<256x128xbf16, #tpu.memory_space<vmem>>, %arg4: memref<1x128xf32, #tpu.memory_space<vmem>>, %arg5: memref<2x128xf32, #tpu.memory_space<vmem>>) attributes {dimension_semantics = [#tpu.dimension_semantics<parallel>], iteration_bounds = array<i64: 1>, scalar_prefetch = 1 : i64, scratch_operands = 0 : i64, tpu.core_type = #tpu.core_type<tc>, window_params = [{transform_indices = @transform_0, window_bounds = array<i64: 2, 128>}, {pipeline_mode = #tpu.pipeline_mode<synchronous>, transform_indices = @transform_1, window_bounds = array<i64: 256, 128>}, {pipeline_mode = #tpu.pipeline_mode<synchronous>, transform_indices = @transform_2, window_bounds = array<i64: 1, 128>}, {transform_indices = @transform_3, window_bounds = array<i64: 2, 128>}]} {
    %c0 = arith.constant 0 : index
    %0 = memref.load %arg1[%c0] : memref<6xi32, #tpu.memory_space<smem>>
    %c1 = arith.constant 1 : index
    %1 = memref.load %arg1[%c1] : memref<6xi32, #tpu.memory_space<smem>>
    %c2 = arith.constant 2 : index
    %2 = memref.load %arg1[%c2] : memref<6xi32, #tpu.memory_space<smem>>
    %c3 = arith.constant 3 : index
    %3 = memref.load %arg1[%c3] : memref<6xi32, #tpu.memory_space<smem>>
    %c4 = arith.constant 4 : index
    %4 = memref.load %arg1[%c4] : memref<6xi32, #tpu.memory_space<smem>>
    %c5 = arith.constant 5 : index
    %5 = memref.load %arg1[%c5] : memref<6xi32, #tpu.memory_space<smem>>
    %c10_i32 = arith.constant 10 : i32
    %6 = arith.muli %c10_i32, %0 : i32
    %7 = arith.addi %6, %1 : i32
    %c10_i32_0 = arith.constant 10 : i32
    %8 = arith.muli %c10_i32_0, %2 : i32
    %9 = arith.addi %8, %3 : i32
    %c10_i32_1 = arith.constant 10 : i32
    %10 = arith.muli %c10_i32_1, %4 : i32
    %11 = arith.addi %10, %5 : i32
    %12 = arith.subi %0, %4 : i32
    %13 = math.absi %12 : i32
    %c0_i32 = arith.constant 0 : i32
    %14 = arith.cmpi sle, %13, %c0_i32 : i32
    %15 = arith.subi %1, %5 : i32
    %16 = math.absi %15 : i32
    %c0_i32_2 = arith.constant 0 : i32
    %17 = arith.cmpi sle, %16, %c0_i32_2 : i32
    %18 = arith.andi %14, %17 : i1
    %19 = arith.subi %2, %4 : i32
    %20 = math.absi %19 : i32
    %c2_i32 = arith.constant 2 : i32
    %21 = arith.cmpi sle, %20, %c2_i32 : i32
    %22 = arith.subi %3, %5 : i32
    %23 = math.absi %22 : i32
    %c2_i32_3 = arith.constant 2 : i32
    %24 = arith.cmpi sle, %23, %c2_i32_3 : i32
    %25 = arith.andi %21, %24 : i1
    %26 = arith.ori %18, %25 : i1
    %27 = tpu.iota {dimensions = array<i32: 1>} : vector<2x128xi32>
    %28 = vector.broadcast %9 : i32 to vector<2x128xi32>
    %29 = arith.cmpi eq, %27, %28 : vector<2x128xi32>
    %30 = vector.broadcast %11 : i32 to vector<2x128xi32>
    %31 = arith.cmpi eq, %27, %30 : vector<2x128xi32>
    %32 = vector.broadcast %26 : i1 to vector<2x128xi1>
    %33 = arith.andi %31, %32 : vector<2x128xi1>
    %34 = vector.broadcast %7 : i32 to vector<2x128xi32>
    %35 = arith.cmpi eq, %27, %34 : vector<2x128xi32>
    %cst = arith.constant 1.000000e+00 : f32
    %cst_4 = arith.constant 0.000000e+00 : f32
    %36 = vector.broadcast %cst : f32 to vector<2x128xf32>
    %37 = vector.broadcast %cst_4 : f32 to vector<2x128xf32>
    %38 = arith.select %35, %36, %37 : vector<2x128xi1>, vector<2x128xf32>
    %cst_5 = arith.constant -1.000000e+00 : f32
    %39 = vector.broadcast %cst_5 : f32 to vector<2x128xf32>
    %40 = arith.select %33, %39, %38 : vector<2x128xi1>, vector<2x128xf32>
    %cst_6 = arith.constant 1.000000e+00 : f32
    %41 = vector.broadcast %cst_6 : f32 to vector<2x128xf32>
    %42 = arith.select %29, %41, %40 : vector<2x128xi1>, vector<2x128xf32>
    %c0_7 = arith.constant 0 : index
    %c0_8 = arith.constant 0 : index
    %43 = vector.load %arg2[%c0_7, %c0_8] : memref<2x128xf32, #tpu.memory_space<vmem>>, vector<2x128xf32>
    %44 = arith.addf %42, %43 : vector<2x128xf32>
    %c0_9 = arith.constant 0 : index
    %c0_10 = arith.constant 0 : index
    %45 = vector.load %arg3[%c0_9, %c0_10] : memref<256x128xbf16, #tpu.memory_space<vmem>>, vector<128x128xbf16>
    %c128 = arith.constant 128 : index
    %c0_11 = arith.constant 0 : index
    %46 = vector.load %arg3[%c128, %c0_11] : memref<256x128xbf16, #tpu.memory_space<vmem>>, vector<128x128xbf16>
    %47 = arith.truncf %44 : vector<2x128xf32> to vector<2x128xbf16>
    %cst_12 = arith.constant dense<0.000000e+00> : vector<2x128xf32>
    %48 = tpu.matmul %47, %45, %cst_12 {dimension_numbers = #tpu.dot_dimension_numbers<[1], [0], [0], [1], [0, 0, 1, 1], [], []>} : vector<2x128xbf16>, vector<128x128xbf16>, vector<2x128xf32> -> vector<2x128xf32>
    %cst_13 = arith.constant 0.000000e+00 : f32
    %49 = vector.broadcast %cst_13 : f32 to vector<2x128xf32>
    %50 = arith.maximumf %48, %49 : vector<2x128xf32>
    %51 = arith.truncf %50 : vector<2x128xf32> to vector<2x128xbf16>
    %cst_14 = arith.constant dense<0.000000e+00> : vector<2x128xf32>
    %52 = tpu.matmul %51, %46, %cst_14 {dimension_numbers = #tpu.dot_dimension_numbers<[1], [0], [0], [1], [0, 0, 1, 1], [], []>} : vector<2x128xbf16>, vector<128x128xbf16>, vector<2x128xf32> -> vector<2x128xf32>
    %cst_15 = arith.constant 0.000000e+00 : f32
    %53 = vector.broadcast %cst_15 : f32 to vector<2x128xf32>
    %54 = arith.maximumf %52, %53 : vector<2x128xf32>
    %c0_16 = arith.constant 0 : index
    %c0_17 = arith.constant 0 : index
    %55 = vector.load %arg4[%c0_16, %c0_17] : memref<1x128xf32, #tpu.memory_space<vmem>>, vector<1x128xf32>
    %56 = vector.broadcast %55 : vector<1x128xf32> to vector<2x128xf32>
    %57 = arith.mulf %54, %56 : vector<2x128xf32>
    %cst_18 = arith.constant dense<0.000000e+00> : vector<2xf32>
    %58 = vector.multi_reduction <add>, %57, %cst_18 [1] : vector<2x128xf32> to vector<2xf32>
    %59 = vector.shape_cast %58 : vector<2xf32> to vector<2x1xf32>
    %60 = vector.shape_cast %59 : vector<2x1xf32> to vector<2x1xf32>
    %61 = vector.broadcast %60 : vector<2x1xf32> to vector<2x128xf32>
    %c0_19 = arith.constant 0 : index
    %c0_20 = arith.constant 0 : index
    %62 = vector.load %arg5[%c0_19, %c0_20] : memref<2x128xf32, #tpu.memory_space<vmem>>, vector<2x128xf32>
    tpu.vector_store %arg5[%c0_19, %c0_20], %61 {strides = array<i32>} : memref<2x128xf32, #tpu.memory_space<vmem>>, vector<2x128xf32>,
    return
  }
  func.func @transform_0(%arg0: i32, %arg1: memref<6xi32, #tpu.memory_space<smem>>) -> (i32, i32) {
    %c0_i32 = arith.constant 0 : i32
    %c0_i32_0 = arith.constant 0 : i32
    return %arg0, %c0_i32 : i32, i32
  }
  func.func @transform_1(%arg0: i32, %arg1: memref<6xi32, #tpu.memory_space<smem>>) -> (i32, i32) {
    %c0_i32 = arith.constant 0 : i32
    %c0_i32_0 = arith.constant 0 : i32
    %c0_i32_1 = arith.constant 0 : i32
    return %c0_i32, %c0_i32_0 : i32, i32
  }
  func.func @transform_2(%arg0: i32, %arg1: memref<6xi32, #tpu.memory_space<smem>>) -> (i32, i32) {
    %c0_i32 = arith.constant 0 : i32
    %c0_i32_0 = arith.constant 0 : i32
    %c0_i32_1 = arith.constant 0 : i32
    return %c0_i32, %c0_i32_0 : i32, i32
  }
  func.func @transform_3(%arg0: i32, %arg1: memref<6xi32, #tpu.memory_space<smem>>) -> (i32, i32) {
    %c0_i32 = arith.constant 0 : i32
    %c0_i32_0 = arith.constant 0 : i32
    return %arg0, %c0_i32 : i32, i32
  }
}

</mosaic_0001>

<llo_original>
// kernel: critic_forward.1
$region0: #{critic_forward.1}
  #allocation0 [shape = 'u32[]', space=smem, size = 0x4, offset = 0x4, fixed_abs, tag = 'smem constant byte address 0x4 - core index']
  #allocation1 [shape = 'u32[72,128]{1,0:T(1,128)}', space=vmem, size = 0x9000, scoped, tag = 'internal scratch']
  #allocation2 [shape = 's32[1]{0}', space=sflag, size = 0x4, scoped, tag = 'scoped memory for critic_forward.1']
  #allocation3 [shape = 'u8[512]{0}', space=smem, size = 0x200, scoped, tag = 'prefetched SMEM operand 0']
  %s0 = inlined_call_operand.vmem [shape: s32[6], index: 0, kind: input, shape index: {}]
  %s1 = inlined_call_operand.vmem [shape: f32[2,128], index: 1, kind: input, shape index: {}]
  %s2 = inlined_call_operand.hbm [shape: bf16[256,128], index: 2, kind: input, shape index: {}]
  %s3 = inlined_call_operand.vmem [shape: f32[1,128], index: 3, kind: input, shape index: {}]
  %s4 = inlined_call_operand.vmem [shape: f32[2,128], index: 4, kind: output, shape index: {}]
  %s5 = sld [smem:[#allocation0]]
  $region26: #{critic_forward.1} parent=0
    _
  %s7 = ssub.s32 1, %s5
  %s8 = scalar_select 0, %s7, %s5
  %s10 = sshll.u32 %s0, 4
  %s11 = int_to_ptr.vmem [resolvable:$true] %s10
  %13 = dma.vmem_to_smem %s11, 16, [#allocation3], [#allocation2]
  %15 = dma.done [#allocation2], 16
  %16 = sfence
  $region1: #{critic_forward.1} parent=0
    #allocation4 [shape = 'u8[65536]{0}', space=vmem, size = 0x10000, scoped, tag = 'input window, operand 2, single buffered']
    #allocation5 [shape = 's32[1]{0}', space=sflag, size = 0x4, scoped, tag = 'scoped memory for critic_forward.1']
    %17 = vsyncpa [#allocation5], 0
    // Predicated region
    $region2: #{critic_forward.1} parent=1 // pred_check
      _
    $region3: #{critic_forward.1} parent=1 // pred_check_branch
      %19 = sbr.rel (0) target = $region5
    $region4: #{critic_forward.1} parent=1 // pred_region
      _
    $region5: #{critic_forward.1} parent=1 // pred_fallthru
      _
    // Predicated region
    $region6: #{critic_forward.1} parent=1 // pred_check
      _
    $region7: #{critic_forward.1} parent=1 // pred_check_branch
      %21 = sbr.rel (0) target = $region9
    $region8: #{critic_forward.1} parent=1 // pred_region
      %23 = vsyncadd [#allocation5], 0
      %s24 = sshll.u32 %s2, 4
      %s25 = int_to_ptr.hbm [resolvable:$true] %s24
      %s26 = sshll.u32 [#allocation4], 4
      %s27 = int_to_ptr.vmem [resolvable:$true] %s26
      %32 = dma.hbm_to_vmem [thread:$0]  %s25, 2048, %s27, [#allocation5], 64, 64, 4
    $region9: #{critic_forward.1} parent=1 // pred_fallthru
      _
    // Predicated region
    $region10: #{critic_forward.1} parent=1 // pred_check
      _
    $region11: #{critic_forward.1} parent=1 // pred_check_branch
      %34 = sbr.rel (0) target = $region13
    $region12: #{critic_forward.1} parent=1 // pred_region
      _
    $region13: #{critic_forward.1} parent=1 // pred_fallthru
      _
    // Predicated region
    $region14: #{critic_forward.1} parent=1 // pred_check
      _
    $region15: #{critic_forward.1} parent=1 // pred_check_branch
      %36 = sbr.rel (0) target = $region17
    $region16: #{critic_forward.1} parent=1 // pred_region
      %38 = dma.done [#allocation5], 2048
    $region17: #{critic_forward.1} parent=1 // pred_fallthru
      _
    %s39 = sld [smem:[#allocation3]]
    %s40 = sld [smem:[#allocation3 + $0x1]]
    %s41 = sld [smem:[#allocation3 + $0x2]]
    %s42 = sld [smem:[#allocation3 + $0x3]]
    %s43 = sld [smem:[#allocation3 + $0x4]]
    %s44 = sld [smem:[#allocation3 + $0x5]]
    %s45 = smul.u32 %s39, 10
    %s46 = sadd.s32 %s45, %s40
    %s47 = smul.u32 %s41, 10
    %s48 = sadd.s32 %s47, %s42
    %s49 = smul.u32 %s43, 10
    %s50 = sadd.s32 %s49, %s44
    %s51 = ssub.s32 %s39, %s43
    %s52 = sshra.s32 %s51, 31
    %s53 = sadd.s32 %s51, %s52
    %s54 = sxor.u32 %s53, %s52
    %p55 = scmp.le.s32.totalorder %s54, 0
    %s56 = ssub.s32 %s40, %s44
    %s57 = sshra.s32 %s56, 31
    %s58 = sadd.s32 %s56, %s57
    %s59 = sxor.u32 %s58, %s57
    %p60 = scmp.le.s32.totalorder %s59, 0
    %p61 = pnand %p55, %p60
    %p62 = pneg %p61
    %s63 = ssub.s32 %s41, %s43
    %s64 = sshra.s32 %s63, 31
    %s65 = sadd.s32 %s63, %s64
    %s66 = sxor.u32 %s65, %s64
    %p67 = scmp.le.s32.totalorder %s66, 2
    %s68 = ssub.s32 %s42, %s44
    %s69 = sshra.s32 %s68, 31
    %s70 = sadd.s32 %s68, %s69
    %s71 = sxor.u32 %s70, %s69
    %p72 = scmp.le.s32.totalorder %s71, 2
    %p73 = pnand %p67, %p72
    %p74 = pneg %p73
    %p75 = por %p62, %p74
    %v76 = vlaneseq
    %v77 = vand.u32 %v76, 127
    %v78 = vstv %s48
    %vm79 = vcmp.eq.s32.totalorder %v77, %v78
    %v80 = vstv %s50
    %vm81 = vcmp.eq.s32.totalorder %v77, %v80
    %s82 = scalar_select %p75, 1, 0
    %v83 = vstv %s82
    %vm84 = vcmp.eq.s32.totalorder %v83, 1
    %vm85 = vmand %vm81, %vm84
    %v86 = vstv %s46
    %vm87 = vcmp.eq.s32.totalorder %v77, %v86
    %v88 = vsel %vm87, 1.0, 0.0
    %v89 = vsel %vm85, -1.0, %v88
    %v90 = vsel %vm79, 1.0, %v89
    %v91 = vld [vmem:[%s1] sm:$0x3]
    %v92 = vadd.f32 %v90, %v91
    %v93 = vld [vmem:[#allocation4] sm:$0xf]
    %v94 = vld [vmem:[#allocation4 + $0x4] sm:$0xf]
    %v95 = vld [vmem:[#allocation4 + $0x8] sm:$0xf]
    %v96 = vld [vmem:[#allocation4 + $0xc] sm:$0xf]
    %v97 = vld [vmem:[#allocation4 + $0x10] sm:$0xf]
    %v98 = vld [vmem:[#allocation4 + $0x14] sm:$0xf]
    %v99 = vld [vmem:[#allocation4 + $0x18] sm:$0xf]
    %v100 = vld [vmem:[#allocation4 + $0x1c] sm:$0xf]
    %v101 = vld [vmem:[#allocation4 + $0x20] sm:$0xf]
    %v102 = vld [vmem:[#allocation4 + $0x24] sm:$0xf]
    %v103 = vld [vmem:[#allocation4 + $0x28] sm:$0xf]
    %v104 = vld [vmem:[#allocation4 + $0x2c] sm:$0xf]
    %v105 = vld [vmem:[#allocation4 + $0x30] sm:$0xf]
    %v106 = vld [vmem:[#allocation4 + $0x34] sm:$0xf]
    %v107 = vld [vmem:[#allocation4 + $0x38] sm:$0xf]
    %v108 = vld [vmem:[#allocation4 + $0x3c] sm:$0xf]
    %v109 = vld [vmem:[#allocation4 + $0x40] sm:$0xf]
    %v110 = vld [vmem:[#allocation4 + $0x44] sm:$0xf]
    %v111 = vld [vmem:[#allocation4 + $0x48] sm:$0xf]
    %v112 = vld [vmem:[#allocation4 + $0x4c] sm:$0xf]
    %v113 = vld [vmem:[#allocation4 + $0x50] sm:$0xf]
    %v114 = vld [vmem:[#allocation4 + $0x54] sm:$0xf]
    %v115 = vld [vmem:[#allocation4 + $0x58] sm:$0xf]
    %v116 = vld [vmem:[#allocation4 + $0x5c] sm:$0xf]
    %v117 = vld [vmem:[#allocation4 + $0x60] sm:$0xf]
    %v118 = vld [vmem:[#allocation4 + $0x64] sm:$0xf]
    %v119 = vld [vmem:[#allocation4 + $0x68] sm:$0xf]
    %v120 = vld [vmem:[#allocation4 + $0x6c] sm:$0xf]
    %v121 = vld [vmem:[#allocation4 + $0x70] sm:$0xf]
    %v122 = vld [vmem:[#allocation4 + $0x74] sm:$0xf]
    %v123 = vld [vmem:[#allocation4 + $0x78] sm:$0xf]
    %v124 = vld [vmem:[#allocation4 + $0x7c] sm:$0xf]
    %v125 = vpack.c.bf16 %v92, %v92
    %v142 = vunpack.c.l.b16 %v93
    %v143 = vunpack.c.l.b16 %v94
    %v144 = vunpack.c.l.b16 %v95
    %v145 = vunpack.c.l.b16 %v96
    %v146 = vunpack.c.l.b16 %v97
    %v147 = vunpack.c.l.b16 %v98
    %v148 = vunpack.c.l.b16 %v99
    %v149 = vunpack.c.l.b16 %v100
    %v150 = vunpack.c.l.b16 %v101
    %v151 = vunpack.c.l.b16 %v102
    %v152 = vunpack.c.l.b16 %v103
    %v153 = vunpack.c.l.b16 %v104
    %v154 = vunpack.c.l.b16 %v105
    %v155 = vunpack.c.l.b16 %v106
    %v156 = vunpack.c.l.b16 %v107
    %v157 = vunpack.c.l.b16 %v108
    %v158 = vpack.c.b16 %v143, %v142
    %v159 = vpack.c.b16 %v145, %v144
    %v160 = vpack.c.b16 %v147, %v146
    %v161 = vpack.c.b16 %v149, %v148
    %v162 = vpack.c.b16 %v151, %v150
    %v163 = vpack.c.b16 %v153, %v152
    %v164 = vpack.c.b16 %v155, %v154
    %v165 = vpack.c.b16 %v157, %v156
    %174 = vmatpush.bf16.msra.mxu0 %v165
    %175 = vmatpush.bf16.msra.mxu0 %v164
    %176 = vmatpush.bf16.msra.mxu0 %v163
    %177 = vmatpush.bf16.msra.mxu0 %v162
    %178 = vmatpush.bf16.msra.mxu0 %v161
    %179 = vmatpush.bf16.msra.mxu0 %v160
    %180 = vmatpush.bf16.msra.mxu0 %v159
    %181 = vmatpush.bf16.msra.mxu0 %v158
    %182 = vmatmul.bf16.gmra.mxu0 %v125
    %v183 = vpop.f32.mrf.mxu0
    %v184 = vadd.f32 0.0, %v183
    %v185 = vpop.f32.mrf.mxu0
    %186 = vdwg.mxu0
    %v187 = vmax.f32 %v184, 0.0
    %v188 = vpack.c.bf16 %v187, %v187
    %v205 = vunpack.c.l.b16 %v109
    %v206 = vunpack.c.l.b16 %v110
    %v207 = vunpack.c.l.b16 %v111
    %v208 = vunpack.c.l.b16 %v112
    %v209 = vunpack.c.l.b16 %v113
    %v210 = vunpack.c.l.b16 %v114
    %v211 = vunpack.c.l.b16 %v115
    %v212 = vunpack.c.l.b16 %v116
    %v213 = vunpack.c.l.b16 %v117
    %v214 = vunpack.c.l.b16 %v118
    %v215 = vunpack.c.l.b16 %v119
    %v216 = vunpack.c.l.b16 %v120
    %v217 = vunpack.c.l.b16 %v121
    %v218 = vunpack.c.l.b16 %v122
    %v219 = vunpack.c.l.b16 %v123
    %v220 = vunpack.c.l.b16 %v124
    %v221 = vpack.c.b16 %v206, %v205
    %v222 = vpack.c.b16 %v208, %v207
    %v223 = vpack.c.b16 %v210, %v209
    %v224 = vpack.c.b16 %v212, %v211
    %v225 = vpack.c.b16 %v214, %v213
    %v226 = vpack.c.b16 %v216, %v215
    %v227 = vpack.c.b16 %v218, %v217
    %v228 = vpack.c.b16 %v220, %v219
    %237 = vmatpush.bf16.msra.mxu0 %v228
    %238 = vmatpush.bf16.msra.mxu0 %v227
    %239 = vmatpush.bf16.msra.mxu0 %v226
    %240 = vmatpush.bf16.msra.mxu0 %v225
    %241 = vmatpush.bf16.msra.mxu0 %v224
    %242 = vmatpush.bf16.msra.mxu0 %v223
    %243 = vmatpush.bf16.msra.mxu0 %v222
    %244 = vmatpush.bf16.msra.mxu0 %v221
    %245 = vmatmul.bf16.gmra.mxu0 %v188
    %v246 = vpop.f32.mrf.mxu0
    %v247 = vadd.f32 0.0, %v246
    %v248 = vpop.f32.mrf.mxu0
    %249 = vdwg.mxu0
    %v250 = vmax.f32 %v247, 0.0
    %v251 = vld [vmem:[%s3] sm:$0x1]
    %v253 = vperm.slane %v251, 0
    %v255 = vmul.f32 %v250, %v253
    %vm256 = vcmask 1041408
    %v257 = vsel %vm256, %v255, 0.0
    %258 = vadd.xlane.f32.xlu0 %v257
    %v259 = vpop.xlane.xlu0 %258
    %260 = vst [vmem:[%s4] sm:$0x3] %v259
    // Predicated region
    $region18: #{critic_forward.1} parent=1 // pred_check
      _
    $region19: #{critic_forward.1} parent=1 // pred_check_branch
      %262 = sbr.rel (0) target = $region21
    $region20: #{critic_forward.1} parent=1 // pred_region
      _
    $region21: #{critic_forward.1} parent=1 // pred_fallthru
      _
    // Predicated region
    $region22: #{critic_forward.1} parent=1 // pred_check
      _
    $region23: #{critic_forward.1} parent=1 // pred_check_branch
      %264 = sbr.rel (0) target = $region25
    $region24: #{critic_forward.1} parent=1 // pred_region
      _
    $region25: #{critic_forward.1} parent=1 // pred_fallthru
      _
    %265 = vsyncpa [#allocation5], 1

</llo_original>
